<compile_context>
chip_gen: v6e
topology: v6e:2x2x1
jax: 0.10.0
libtpu: 0.0.40
codegen_flags: <defaults>
</compile_context>

<pallas_src>
import jax
import jax.numpy as jnp
from jax.experimental import pallas as pl
from jax.experimental.pallas import tpu as pltpu

_LANE = 128


def _sublane_multiple(dtype) -> int:
    """Minimum second-minor tile multiple for this dtype (8 f32, 16 bf16, 32 int8)."""
    return max(8, 32 // dtype.itemsize)


def _default_block_bytes() -> int:
    """~2 MiB blocks on v5e-class chips (16 MiB scoped VMEM), ~4 MiB on v6e/v7x."""
    try:
        kind = jax.devices()[0].device_kind.lower()
    except Exception:
        return 2 * 1024 * 1024
    if "v6" in kind or "v7" in kind:
        return 4 * 1024 * 1024
    return 2 * 1024 * 1024


def _choose_block(n, f, itemsize, sub, block_bytes):
    """Pick (BN, TF) with BN*TF*itemsize ~= block_bytes and a legal TPU tile:
    BN is a multiple of `sub` or equal to N; TF is a multiple of 128 or equal
    to F (full dim).  No requirement that BN | N or TF | F -- ragged final
    blocks are masked by Pallas."""
    target = max(sub * _LANE, block_bytes // itemsize)
    bn_min = n if n < sub else sub
    if bn_min * f <= target:
        # Small per-sample features: pack many samples per block, full rows.
        bn = target // max(f, 1)
        if bn >= n:
            bn = n
        else:
            bn = max(sub, (bn // sub) * sub)
        return bn, f
    # Large per-sample features: tile along F in lane-dense 128-wide chunks.
    bn = bn_min
    tf = max(_LANE, ((target // bn) // _LANE) * _LANE)
    return bn, tf


# --------------------------------------------------------------------------
# Pallas kernel: out = x * scale[n]   (scale already holds mask / keep_prob)
# --------------------------------------------------------------------------
def _drop_path_kernel(scale_ref, x_ref, o_ref):
    # scale_ref: (BN, 1) per-sample scale in x.dtype (VMEM)
    # x_ref/o_ref: (BN, TF) lane-dense VMEM tiles
    o_ref[...] = x_ref[...] * scale_ref[...]


def drop_path(x, drop_prob: float = 0.0, *, training: bool = False, key=None,
              block_bytes=None, min_pallas_bytes: int = 1 << 20):
    """Per-sample stochastic depth. x: (N, ...) float array."""
    if drop_prob == 0.0 or not training:
        return x
    if key is None:
        raise ValueError("drop_path needs a PRNG key when training")

    keep_prob = 1.0 - float(drop_prob)
    if keep_prob <= 0.0:
        # drop_prob == 1: every path is dropped.  (The PyTorch reference
        # divides by zero here; return the well-defined limit instead.)
        return jnp.zeros_like(x)

    N = x.shape[0]
    F = 1
    for d in x.shape[1:]:
        F *= d

    # Per-sample scale in {0, 1/keep_prob}: floor(keep_prob + U[0,1)) / keep_prob.
    # TODO(synk): torch.rand's RNG stream is not reproducible in JAX; the draw
    # uses jax.random (it could also be generated in-kernel with
    # pltpu.prng_random_bits, same semantics).
    r = jax.random.uniform(key, (N, 1), jnp.float32)
    scale = (jnp.floor(keep_prob + r) * (1.0 / keep_prob)).astype(x.dtype)

    # Tiny inputs: an XLA-fused broadcast multiply beats kernel dispatch.
    if x.size * x.dtype.itemsize < min_pallas_bytes:
        return x * scale.reshape((N,) + (1,) * (x.ndim - 1))

    itemsize = x.dtype.itemsize
    sub = _sublane_multiple(x.dtype)
    if block_bytes is None:
        block_bytes = _default_block_bytes()
    BN, TF = _choose_block(N, F, itemsize, sub, block_bytes)

    x2 = x.reshape(N, F)
    out = pl.pallas_call(
        _drop_path_kernel,
        out_shape=jax.ShapeDtypeStruct((N, F), x.dtype),
        grid=(pl.cdiv(N, BN), pl.cdiv(F, TF)),
        in_specs=[
            pl.BlockSpec((BN, 1), lambda n, f: (n, 0)),    # per-sample scale
            pl.BlockSpec((BN, TF), lambda n, f: (n, f)),   # x tile
        ],
        out_specs=pl.BlockSpec((BN, TF), lambda n, f: (n, f)),
        input_output_aliases={1: 0},   # output may reuse x's buffer (donate x)
        compiler_params=pltpu.CompilerParams(
            dimension_semantics=("parallel", "parallel")),
    )(scale, x2)
    return out.reshape(x.shape)


class DropPath:
    """Mirror of the PyTorch DropPath module (training flag passed explicitly)."""

    def __init__(self, drop_prob=None):
        self.drop_prob = 0.0 if drop_prob is None else float(drop_prob)

    def __call__(self, x, *, training=False, key=None, **kwargs):
        return drop_path(x, self.drop_prob, training=training, key=key, **kwargs)


# --------------------------------------------------------------------------
# Demo / self-check
# --------------------------------------------------------------------------
if __name__ == "__main__":
    key = jax.random.PRNGKey(0)
    kx, kdrop = jax.random.split(key)

    drop_prob = 0.25
    keep_prob = 1.0 - drop_prob
    layer = DropPath(drop_prob=drop_prob)

    def ref(xa, k):
        rr = jax.random.uniform(k, (xa.shape[0], 1), jnp.float32)
        ss = (jnp.floor(keep_prob + rr) / keep_prob).astype(xa.dtype)
        return xa * ss.reshape((xa.shape[0],) + (1,) * (xa.ndim - 1))

    # --- case 1: small (N, C, H, W) f32 activation, kernel path forced ------
    x = jax.random.normal(kx, (2, 4, 16, 16), jnp.float32)

    # eval mode: identity, no kernel
    y_eval = layer(x, training=False)
    assert y_eval.shape == x.shape and bool(jnp.all(y_eval == x))

    y_ref = ref(x, kdrop)   # reference first (kernel output may alias x's buffer)
    y = layer(x, training=True, key=kdrop, min_pallas_bytes=0)
    y = jax.block_until_ready(y)
    assert y.shape == x.shape and y.dtype == x.dtype
    assert bool(jnp.all(jnp.isfinite(y)))
    assert bool(jnp.allclose(y, y_ref, atol=1e-6, rtol=1e-6))

    # default small-input fallback path agrees as well
    y_fb = layer(x, training=True, key=kdrop)
    assert bool(jnp.allclose(y_fb, y_ref, atol=1e-6, rtol=1e-6))

    # --- case 2: bf16, feature size not a multiple of 128 (full-row block) --
    x2 = jax.random.normal(jax.random.PRNGKey(1), (4, 3, 7, 5), jnp.bfloat16)
    k2 = jax.random.PRNGKey(2)
    y2_ref = ref(x2, k2)
    y2 = drop_path(x2, drop_prob, training=True, key=k2, min_pallas_bytes=0)
    y2 = jax.block_until_ready(y2)
    assert bool(jnp.allclose(y2.astype(jnp.float32), y2_ref.astype(jnp.float32),
                             atol=1e-2, rtol=1e-2))

    # --- case 3: feature tiling with a ragged (masked) final lane block -----
    x3 = jax.random.normal(jax.random.PRNGKey(3), (3, 4, 41, 41), jnp.float32)
    k3 = jax.random.PRNGKey(4)
    y3_ref = ref(x3, k3)
    y3 = drop_path(x3, drop_prob, training=True, key=k3,
                   min_pallas_bytes=0, block_bytes=32 * 1024)
    y3 = jax.block_until_ready(y3)
    assert bool(jnp.allclose(y3, y3_ref, atol=1e-6, rtol=1e-6))

    # --- case 4: sample packing with a ragged (masked) final sample block ---
    x4 = jax.random.normal(jax.random.PRNGKey(5), (10, 32, 4, 4), jnp.float32)
    k4 = jax.random.PRNGKey(6)
    y4_ref = ref(x4, k4)
    y4 = drop_path(x4, drop_prob, training=True, key=k4,
                   min_pallas_bytes=0, block_bytes=16 * 1024)
    y4 = jax.block_until_ready(y4)
    assert bool(jnp.allclose(y4, y4_ref, atol=1e-6, rtol=1e-6))

    print("KERNEL_OK")
</pallas_src>

<mosaic_0001>
module attributes {stable_mosaic.version = 11 : i64} {
  func.func @_drop_path_kernel(%arg0: i32, %arg1: i32, %arg2: memref<2x1xf32, #tpu.memory_space<vmem>>, %arg3: memref<2x1024xf32, #tpu.memory_space<vmem>>, %arg4: memref<2x1024xf32, #tpu.memory_space<vmem>>) attributes {dimension_semantics = [#tpu.dimension_semantics<parallel>, #tpu.dimension_semantics<parallel>], iteration_bounds = array<i64: 1, 1>, scalar_prefetch = 0 : i64, scratch_operands = 0 : i64, tpu.core_type = #tpu.core_type<tc>, window_params = [{transform_indices = @transform_0, window_bounds = array<i64: 2, 1>}, {transform_indices = @transform_1, window_bounds = array<i64: 2, 1024>}, {transform_indices = @transform_2, window_bounds = array<i64: 2, 1024>}]} {
    %c0 = arith.constant 0 : index
    %c0_0 = arith.constant 0 : index
    %0 = vector.load %arg3[%c0, %c0_0] : memref<2x1024xf32, #tpu.memory_space<vmem>>, vector<2x1024xf32>
    %c0_1 = arith.constant 0 : index
    %c0_2 = arith.constant 0 : index
    %1 = vector.load %arg2[%c0_1, %c0_2] : memref<2x1xf32, #tpu.memory_space<vmem>>, vector<2x1xf32>
    %2 = vector.broadcast %1 : vector<2x1xf32> to vector<2x1024xf32>
    %3 = arith.mulf %0, %2 : vector<2x1024xf32>
    %c0_3 = arith.constant 0 : index
    %c0_4 = arith.constant 0 : index
    %4 = vector.load %arg4[%c0_3, %c0_4] : memref<2x1024xf32, #tpu.memory_space<vmem>>, vector<2x1024xf32>
    tpu.vector_store %arg4[%c0_3, %c0_4], %3 {strides = array<i32>} : memref<2x1024xf32, #tpu.memory_space<vmem>>, vector<2x1024xf32>,
    return
  }
  func.func @transform_0(%arg0: i32, %arg1: i32) -> (i32, i32) {
    %c0_i32 = arith.constant 0 : i32
    %c0_i32_0 = arith.constant 0 : i32
    return %arg0, %c0_i32 : i32, i32
  }
  func.func @transform_1(%arg0: i32, %arg1: i32) -> (i32, i32) {
    %c0_i32 = arith.constant 0 : i32
    return %arg0, %arg1 : i32, i32
  }
  func.func @transform_2(%arg0: i32, %arg1: i32) -> (i32, i32) {
    %c0_i32 = arith.constant 0 : i32
    return %arg0, %arg1 : i32, i32
  }
}

</mosaic_0001>

<llo_original>
// kernel: tpu_custom_call.1
$region0: #{tpu_custom_call.1}
  #allocation0 [shape = 'u32[]', space=smem, size = 0x4, offset = 0x4, fixed_abs, tag = 'smem constant byte address 0x4 - core index']
  #allocation1 [shape = 'u32[144,128]{1,0:T(1,128)}', space=vmem, size = 0x12000, scoped, tag = 'internal scratch']
  %s0 = inlined_call_operand.vmem [shape: f32[2,1], index: 0, kind: input, shape index: {}]
  %s1 = inlined_call_operand.hbm [shape: f32[2,1024], index: 1, kind: input, shape index: {}, may-alias: {1,2}]
  %s2 = inlined_call_operand.hbm [shape: f32[2,1024], index: 2, kind: output, shape index: {}, may-alias: {1,2}]
  %s3 = sld [smem:[#allocation0]]
  $region22: #{tpu_custom_call.1} parent=0
    _
  %s5 = ssub.s32 1, %s3
  %s6 = scalar_select 0, %s5, %s3
  $region1: #{tpu_custom_call.1} parent=0
    #allocation2 [shape = 'u8[8192]{0}', space=vmem, size = 0x2000, scoped, tag = 'input window, operand 1, single buffered']
    #allocation3 [shape = 's32[1]{0}', space=sflag, size = 0x4, scoped, tag = 'scoped memory for tpu_custom_call.1']
    #allocation4 [shape = 's32[1]{0}', space=sflag, size = 0x4, scoped, tag = 'scoped memory for tpu_custom_call.1']
    #allocation5 [shape = 'u8[8192]{0}', space=vmem, size = 0x2000, scoped, tag = 'output window, operand 0, single buffered']
    %7 = vsyncpa [#allocation3], 0
    %8 = vsyncpa [#allocation4], 0
    // Predicated region
    $region2: #{tpu_custom_call.1} parent=1 // pred_check
      _
    $region3: #{tpu_custom_call.1} parent=1 // pred_check_branch
      %10 = sbr.rel (0) target = $region5
    $region4: #{tpu_custom_call.1} parent=1 // pred_region
      _
    $region5: #{tpu_custom_call.1} parent=1 // pred_fallthru
      _
    // Predicated region
    $region6: #{tpu_custom_call.1} parent=1 // pred_check
      _
    $region7: #{tpu_custom_call.1} parent=1 // pred_check_branch
      %12 = sbr.rel (0) target = $region9
    $region8: #{tpu_custom_call.1} parent=1 // pred_region
      %s14 = ssub.s32 256, 256
      %15 = vsyncadd [#allocation3], %s14
      %s17 = sshll.u32 [#allocation2], 4
      %s18 = int_to_ptr.vmem [resolvable:$true] %s17
      %20 = dma.hbm_to_vmem [thread:$0]  %s1, 256, %s18, [#allocation3]
    $region9: #{tpu_custom_call.1} parent=1 // pred_fallthru
      _
    // Predicated region
    $region10: #{tpu_custom_call.1} parent=1 // pred_check
      _
    $region11: #{tpu_custom_call.1} parent=1 // pred_check_branch
      %22 = sbr.rel (0) target = $region13
    $region12: #{tpu_custom_call.1} parent=1 // pred_region
      %23 = dma.done [#allocation3], 256
    $region13: #{tpu_custom_call.1} parent=1 // pred_fallthru
      _
    %v24 = vld [vmem:[#allocation2] sm:$0xff]
    %v25 = vld [vmem:[#allocation2 + $0x8] sm:$0xff]
    %v26 = vld [vmem:[%s0] sm:$0x3]
    %28 = vset.pattern.permute.xlu0 0
    %29 = vperm.xlu0 %28, %v26
    %v30 = vpop.permute.xlu0 %29
    %v32 = vunpack.c.l.s4 269488144
    %v33 = vunpack.c.0.s8 %v32
    %v34 = vlaneseq
    %v35 = vshrl.u32 %v34, 7
    %v36 = vsub.s32 %v33, %v35
    %v37 = vrot.slane %v30, %v36
    %v39 = vmul.f32 %v24, %v37
    %v40 = vmul.f32 %v25, %v37
    %41 = vst [vmem:[#allocation5] sm:$0xff] %v39
    %42 = vst [vmem:[#allocation5 + $0x8] sm:$0xff] %v40
    // Predicated region
    $region14: #{tpu_custom_call.1} parent=1 // pred_check
      _
    $region15: #{tpu_custom_call.1} parent=1 // pred_check_branch
      %44 = sbr.rel (0) target = $region17
    $region16: #{tpu_custom_call.1} parent=1 // pred_region
      %s46 = ssub.s32 256, 256
      %47 = vsyncadd [#allocation4], %s46
      %s49 = sshll.u32 [#allocation5], 4
      %s50 = int_to_ptr.vmem [resolvable:$true] %s49
      %52 = dma.vmem_to_hbm [thread:$0]  %s50, 256, %s2, [#allocation4]
    $region17: #{tpu_custom_call.1} parent=1 // pred_fallthru
      _
    // Predicated region
    $region18: #{tpu_custom_call.1} parent=1 // pred_check
      _
    $region19: #{tpu_custom_call.1} parent=1 // pred_check_branch
      %54 = sbr.rel (0) target = $region21
    $region20: #{tpu_custom_call.1} parent=1 // pred_region
      %55 = dma.done [#allocation4], 256
    $region21: #{tpu_custom_call.1} parent=1 // pred_fallthru
      _
    %56 = vsyncpa [#allocation3], 1
    %57 = vsyncpa [#allocation4], 1

</llo_original>
